<compile_context>
chip_gen: v6e
topology: v6e:2x2x1
jax: 0.10.0
libtpu: 0.0.40
codegen_flags: <defaults>
</compile_context>

<pallas_src>
import jax
import jax.numpy as jnp
from jax.experimental import pallas as pl
from jax.experimental.pallas import tpu as pltpu


# ------------------------------ config (toy) ---------------------------------
N_CONTEXT = 8      # config.scheduler_n_context  (== n_passages)
NUM_LAYERS = 12    # only used to build plausible `layers` inputs
BSZ = 2

# Below this many elements the pallas_call is 100% fixed overhead -> plain jnp.
_PALLAS_MIN_ELEMS = 64 * 1024
# Conservative per-call VMEM budget (bytes).  Sized so the single-block path
# and the double-buffered grid path both fit v5e's 16 MiB scoped default and
# v7x's tighter physical VMEM without touching vmem_limit_bytes.
_VMEM_BUDGET_BYTES = 8 * 1024 * 1024


# -------------------------------- kernel --------------------------------------
def _dummy_scheduler_kernel(w_ref, x_ref, o_ref):
    # w_ref: SMEM (1,) f32 scalar parameter
    # x_ref / o_ref: VMEM (tm, tn) blocks, same dtype as the input logits
    w = w_ref[0]
    o_ref[...] = (w * x_ref[...].astype(jnp.float32)).astype(o_ref.dtype)


# ------------------------------ tiling plan ------------------------------------
def _plan(bsz, n_passages, itemsize):
    """Pick gridless whole-array vs. a 1-D grid over big dense slabs.

    Returns None for "single full-array block"; otherwise a dict with
    grid / block_shape / index_map.  Blocks keep one axis at full extent so the
    other axis only needs the (8, 128) divisibility, and stores stay unmasked
    and lane-dense.
    """
    total_bytes = bsz * n_passages * itemsize
    if 2 * total_bytes <= _VMEM_BUDGET_BYTES:          # in + out, one block each
        return None

    # Prefer tiling rows: keeps the last dim full width (lane-dense stores).
    if bsz >= 8:
        row_bytes = n_passages * itemsize
        tm = (_VMEM_BUDGET_BYTES // (4 * row_bytes)) // 8 * 8   # 4 = 2 bufs * (in+out)
        if tm >= 8:
            tm = min(tm, bsz)
            return dict(grid=(pl.cdiv(bsz, tm),),
                        block=(tm, n_passages),
                        index_map=lambda i: (i, 0))

    # Few, very long rows: tile columns in 128-lane-aligned slabs.
    if n_passages >= 128 and n_passages % 128 == 0:
        col_bytes = bsz * itemsize
        tn = (_VMEM_BUDGET_BYTES // (4 * col_bytes)) // 128 * 128
        if tn >= 128:
            tn = min(tn, n_passages)
            return dict(grid=(pl.cdiv(n_passages, tn),),
                        block=(bsz, tn),
                        index_map=lambda j: (0, j))

    # TODO(synk): huge array with bsz < 8 and n_passages % 128 != 0 would need a
    # masked-tail re-layout; fall back to a single block (raise VMEM limit then).
    return None


# -------------------------------- wrapper --------------------------------------
def dummy_scheduler_forward(has_answer_logits, layers, ranks, params,
                            *, force_pallas=False):
    """DummyScheduler.forward: priorities = weight * has_answer_logits.

    Args:
      has_answer_logits: float [bsz, n_passages] (f32 or bf16)
      layers:            int   [bsz, n_passages]  (unused by the module)
      ranks:             int   [bsz, n_passages]  (unused by the module)
      params: dict with "weight" (scalar parameter)
      force_pallas: run the Pallas kernel even below the size threshold.

    Returns:
      priorities: [bsz, n_passages], same dtype as has_answer_logits.
    """
    del layers, ranks  # DummyScheduler ignores position information.
    bsz, n_passages = has_answer_logits.shape
    M = bsz * n_passages
    dtype = has_answer_logits.dtype
    itemsize = jnp.dtype(dtype).itemsize

    # Tiny problem: the custom-call launch dwarfs the ~M FLOPs of work; let XLA
    # fuse the scalar multiply into surrounding ops instead.
    if M < _PALLAS_MIN_ELEMS and not force_pallas:
        w = jnp.asarray(params["weight"], jnp.float32)
        return (w * has_answer_logits.astype(jnp.float32)).astype(dtype)

    w = jnp.asarray(params["weight"], jnp.float32).reshape(1)   # scalar -> SMEM
    out_shape = jax.ShapeDtypeStruct((bsz, n_passages), dtype)
    cost = pl.CostEstimate(flops=M, transcendentals=0,
                           bytes_accessed=2 * M * itemsize)

    plan = _plan(bsz, n_passages, itemsize)
    if plan is None:
        # Whole array as one VMEM block: no grid, no double-buffering, no
        # wrapper-side reshapes bracketing the call.
        return pl.pallas_call(
            _dummy_scheduler_kernel,
            out_shape=out_shape,
            in_specs=[
                pl.BlockSpec(memory_space=pltpu.MemorySpace.SMEM),   # weight
                pl.BlockSpec(memory_space=pltpu.MemorySpace.VMEM),   # logits
            ],
            out_specs=pl.BlockSpec(memory_space=pltpu.MemorySpace.VMEM),
            cost_estimate=cost,
        )(w, has_answer_logits)

    # Large shapes: 1-D grid over big dense slabs; the axis is embarrassingly
    # parallel, so it can shard across v7x's 2 TensorCores.
    return pl.pallas_call(
        _dummy_scheduler_kernel,
        out_shape=out_shape,
        grid=plan["grid"],
        in_specs=[
            pl.BlockSpec(memory_space=pltpu.MemorySpace.SMEM),       # weight
            pl.BlockSpec(plan["block"], plan["index_map"]),          # logits
        ],
        out_specs=pl.BlockSpec(plan["block"], plan["index_map"]),
        cost_estimate=cost,
        compiler_params=pltpu.CompilerParams(
            dimension_semantics=("parallel",)),
    )(w, has_answer_logits)


# ------------------------- deterministic param init ----------------------------
def init_params(key):
    # nn.Parameter(torch.tensor(1.0)) in the module; use a perturbed value so
    # the test actually exercises the multiply.
    w = 1.0 + 0.5 * jax.random.normal(key, (), jnp.float32)
    # BaseScheduler.init_priorities (probs_to_logits of 0.5/(i+1)); only used
    # by .act(), not by forward() — kept for completeness.
    init_probs = jnp.array([0.5 / (i + 1) for i in range(N_CONTEXT)], jnp.float32)
    init_priorities = jnp.log(init_probs) - jnp.log1p(-init_probs)
    return {"weight": w, "init_priorities": init_priorities}


# ---------------------------- pure-JAX reference --------------------------------
def reference_forward(has_answer_logits, layers, ranks, params):
    del layers, ranks
    return params["weight"] * has_answer_logits


# ----------------------------------- main ---------------------------------------
if __name__ == "__main__":
    key = jax.random.PRNGKey(0)
    kp, k1, k2, k3 = jax.random.split(key, 4)
    params = init_params(kp)

    # --- small (module-sized) shapes: exercise the single-block Pallas path ---
    has_answer_logits = jax.random.normal(k1, (BSZ, N_CONTEXT), jnp.float32)
    layers = jax.random.randint(k2, (BSZ, N_CONTEXT), 0, NUM_LAYERS + 1,
                                dtype=jnp.int32)
    ranks = jnp.broadcast_to(jnp.arange(N_CONTEXT, dtype=jnp.int32),
                             (BSZ, N_CONTEXT))

    priorities = dummy_scheduler_forward(has_answer_logits, layers, ranks,
                                         params, force_pallas=True)
    priorities = jax.block_until_ready(priorities)

    ref = reference_forward(has_answer_logits, layers, ranks, params)
    assert priorities.shape == (BSZ, N_CONTEXT)
    assert jnp.allclose(priorities, ref, atol=1e-6, rtol=1e-6), (
        "mismatch vs reference (small / single-block path)")

    # Threshold fallback path (no Pallas) must match too.
    fast = dummy_scheduler_forward(has_answer_logits, layers, ranks, params)
    assert jnp.allclose(jax.block_until_ready(fast), ref, atol=1e-6, rtol=1e-6)

    # --- larger shape: exercise the tiled / parallel-grid path ---
    big_b, big_p = 2048, 1024
    big_logits = jax.random.normal(k3, (big_b, big_p), jnp.float32)
    big_layers = jnp.zeros((big_b, big_p), jnp.int32)
    big_ranks = jnp.broadcast_to(jnp.arange(big_p, dtype=jnp.int32),
                                 (big_b, big_p))
    big_out = dummy_scheduler_forward(big_logits, big_layers, big_ranks, params)
    big_out = jax.block_until_ready(big_out)
    big_ref = reference_forward(big_logits, big_layers, big_ranks, params)
    assert jnp.allclose(big_out, big_ref, atol=1e-5, rtol=1e-5), (
        "mismatch vs reference (large / tiled path)")

    print("KERNEL_OK")
</pallas_src>

<mosaic_0001>
module attributes {stable_mosaic.version = 11 : i64} {
  func.func @_dummy_scheduler_kernel(%arg0: memref<1xf32, #tpu.memory_space<smem>>, %arg1: memref<2x8xf32, #tpu.memory_space<vmem>>, %arg2: memref<2x8xf32, #tpu.memory_space<vmem>>) attributes {dimension_semantics = [], scalar_prefetch = 0 : i64, scratch_operands = 0 : i64, tpu.core_type = #tpu.core_type<tc>} {
    %c0 = arith.constant 0 : index
    %0 = memref.load %arg0[%c0] : memref<1xf32, #tpu.memory_space<smem>>
    %c0_0 = arith.constant 0 : index
    %c0_1 = arith.constant 0 : index
    %1 = vector.load %arg1[%c0_0, %c0_1] : memref<2x8xf32, #tpu.memory_space<vmem>>, vector<2x8xf32>
    %2 = vector.broadcast %0 : f32 to vector<2x8xf32>
    %3 = arith.mulf %2, %1 : vector<2x8xf32>
    %c0_2 = arith.constant 0 : index
    %c0_3 = arith.constant 0 : index
    %4 = vector.load %arg2[%c0_2, %c0_3] : memref<2x8xf32, #tpu.memory_space<vmem>>, vector<2x8xf32>
    tpu.vector_store %arg2[%c0_2, %c0_3], %3 {strides = array<i32>} : memref<2x8xf32, #tpu.memory_space<vmem>>, vector<2x8xf32>,
    return
  }
}

</mosaic_0001>

<llo_original>
// kernel: tpu_custom_call.1
$region0: #{tpu_custom_call.1}
  #allocation0 [shape = 'u32[]', space=smem, size = 0x4, offset = 0x4, fixed_abs, tag = 'smem constant byte address 0x4 - core index']
  #allocation1 [shape = 'u32[144,128]{1,0:T(1,128)}', space=vmem, size = 0x12000, scoped, tag = 'internal scratch']
  #allocation2 [shape = 'f32[1]{0:T(128)S(6)}', space=smem, size = 0x200, scoped, tag = 'scoped memory for tpu_custom_call.1']
  %s0 = inlined_call_operand.<no memory space> [shape: f32[1], index: 0, kind: input, shape index: {}]
  %s1 = inlined_call_operand.vmem [shape: f32[2,8], index: 1, kind: input, shape index: {}]
  %s2 = inlined_call_operand.hbm [shape: f32[2,8], index: 2, kind: output, shape index: {}]
  %s3 = sld [smem:[#allocation0]]
  $region18: #{tpu_custom_call.1} parent=0
    _
  %s5 = ssub.s32 1, %s3
  %s6 = scalar_select 0, %s5, %s3
  %7 = sst [smem:[#allocation2]] %s0
  $region1: #{tpu_custom_call.1} parent=0
    #allocation3 [shape = 'u8[1024]{0}', space=vmem, size = 0x400, scoped, tag = 'output window, operand 0, single buffered']
    #allocation4 [shape = 's32[1]{0}', space=sflag, size = 0x4, scoped, tag = 'scoped memory for tpu_custom_call.1']
    %8 = vsyncpa [#allocation4], 0
    // Predicated region
    $region2: #{tpu_custom_call.1} parent=1 // pred_check
      _
    $region3: #{tpu_custom_call.1} parent=1 // pred_check_branch
      %10 = sbr.rel (0) target = $region5
    $region4: #{tpu_custom_call.1} parent=1 // pred_region
      _
    $region5: #{tpu_custom_call.1} parent=1 // pred_fallthru
      _
    // Predicated region
    $region6: #{tpu_custom_call.1} parent=1 // pred_check
      _
    $region7: #{tpu_custom_call.1} parent=1 // pred_check_branch
      %12 = sbr.rel (0) target = $region9
    $region8: #{tpu_custom_call.1} parent=1 // pred_region
      _
    $region9: #{tpu_custom_call.1} parent=1 // pred_fallthru
      _
    %s13 = sld [smem:[#allocation2]]
    %v14 = vld [vmem:[%s1] sm:$0x3]
    %v15 = vstv %s13
    %v16 = vmul.f32 %v15, %v14
    %vm17 = vcmask 58368
    %18 = vst.msk [vmem:[#allocation3] sm:$0x3] %vm17, %v16
    // Predicated region
    $region10: #{tpu_custom_call.1} parent=1 // pred_check
      _
    $region11: #{tpu_custom_call.1} parent=1 // pred_check_branch
      %20 = sbr.rel (0) target = $region13
    $region12: #{tpu_custom_call.1} parent=1 // pred_region
      %s22 = ssub.s32 32, 32
      %23 = vsyncadd [#allocation4], %s22
      %s25 = sshll.u32 [#allocation3], 4
      %s26 = int_to_ptr.vmem [resolvable:$true] %s25
      %28 = dma.vmem_to_hbm [thread:$0]  %s26, 32, %s2, [#allocation4]
    $region13: #{tpu_custom_call.1} parent=1 // pred_fallthru
      _
    // Predicated region
    $region14: #{tpu_custom_call.1} parent=1 // pred_check
      _
    $region15: #{tpu_custom_call.1} parent=1 // pred_check_branch
      %30 = sbr.rel (0) target = $region17
    $region16: #{tpu_custom_call.1} parent=1 // pred_region
      %31 = dma.done [#allocation4], 32
    $region17: #{tpu_custom_call.1} parent=1 // pred_fallthru
      _
    %32 = vsyncpa [#allocation4], 1

</llo_original>
